<compile_context>
chip_gen: v5e
topology: v5e:2x2
jax: 0.10.0
libtpu: 0.0.40
codegen_flags: <defaults>
</compile_context>

<pallas_src>
import functools

import jax
import jax.numpy as jnp
from jax import lax
from jax.experimental import pallas as pl
from jax.experimental.pallas import tpu as pltpu

N_EMBD = 128          # fixed by the PyTorch module
NUM_HEADS = 4
HEAD_SIZE = 32        # head_size * num_heads == n_embd
BLOCK_SIZE = 256      # causal-mask buffer size in the module (T <= block_size)


# ---------------------------------------------------------------------------
# Fused MHA kernel: one grid step == Bb batch elements, everything in VMEM.
# ---------------------------------------------------------------------------
def _mha_kernel(x_ref, wqkv_ref, wp_ref, bp_ref, o_ref, *, num_heads, head_size):
    wqkv = wqkv_ref[...]                 # (C, 3*H*hs) bf16; Q columns pre-scaled
    wp = wp_ref[...]                     # (H*hs, C)   bf16
    bp = bp_ref[...]                     # (1, C)      f32
    hhs = num_heads * head_size

    bb, T, C = x_ref.shape

    row = lax.broadcasted_iota(jnp.int32, (T, T), 0)   # query index
    col = lax.broadcasted_iota(jnp.int32, (T, T), 1)   # key index
    causal = col <= row                  # diagonal kept -> no fully-masked row

    for b in range(bb):                  # Bb is small/static (<= 8); static unroll
        # bf16 MXU operand, f32 accumulation (MXU native input precision).
        x = x_ref[b].astype(jnp.bfloat16)                              # (T, C)
        qkv = jnp.dot(x, wqkv, preferred_element_type=jnp.float32)     # (T, 3*H*hs) f32

        # Projection accumulator: head concat folded into the projection, so
        # head iterations are chained through `acc` (bounds live (T, T) temps).
        acc = jnp.zeros((T, C), jnp.float32)
        for h in range(num_heads):
            lo = h * head_size
            qh = qkv[:, lo:lo + head_size].astype(jnp.bfloat16)            # scaled q
            kh = qkv[:, hhs + lo:hhs + lo + head_size].astype(jnp.bfloat16)
            vh = qkv[:, 2 * hhs + lo:2 * hhs + lo + head_size].astype(jnp.bfloat16)

            # q @ k^T via dot_general (contract last dims) — no transposed copy of k.
            scores = lax.dot_general(qh, kh, (((1,), (1,)), ((), ())),
                                     preferred_element_type=jnp.float32)   # (T, T)
            scores = jnp.where(causal, scores, -jnp.inf)

            # Softmax statistics in f32 (safe on all generations).
            m = jnp.max(scores, axis=-1, keepdims=True)
            p = jnp.exp(scores - m)
            denom = jnp.sum(p, axis=-1, keepdims=True)

            # Unnormalized probs @ V, then deferred normalization on (T, hs)
            # (T*hs multiplies instead of T*T; reciprocal runs on the EUP slot).
            oh = jnp.dot(p.astype(jnp.bfloat16), vh,
                         preferred_element_type=jnp.float32)                # (T, hs)
            oh = oh * pl.reciprocal(denom, approx=True)

            # Fold head concat into the output projection (bf16 MXU operands).
            acc = acc + jnp.dot(oh.astype(jnp.bfloat16),
                                wp[lo:lo + head_size, :],
                                preferred_element_type=jnp.float32)         # (T, C)

        o_ref[b] = acc + bp              # bias broadcast-added at store


# ---------------------------------------------------------------------------
# Host-side packing (done ONCE, outside the per-call path)
# ---------------------------------------------------------------------------
def pack_mha_params(wq, wk, wv, wp, bp):
    """wq/wk/wv: (H, C, hs); wp: (H*hs, C); bp: (C,) ->
       (wqkv bf16 (C, 3*H*hs) with scale folded into Q, wp bf16, bias f32 (1, C))."""
    H, C, hs = wq.shape
    scale = jnp.float32(hs) ** -0.5
    wq_s = jnp.transpose(wq, (1, 0, 2)).reshape(C, H * hs) * scale
    wk_s = jnp.transpose(wk, (1, 0, 2)).reshape(C, H * hs)
    wv_s = jnp.transpose(wv, (1, 0, 2)).reshape(C, H * hs)
    wqkv = jnp.concatenate([wq_s, wk_s, wv_s], axis=-1).astype(jnp.bfloat16)
    return wqkv, wp.astype(jnp.bfloat16), bp.reshape(1, C).astype(jnp.float32)


def _pick_block_b(B, max_bb=8):
    """Largest divisor of B (<= max_bb) that still leaves a grid of >= 2 steps
    (so both v7x TensorCores get work); Bb=1 for B=1."""
    best = 1
    for bb in range(1, min(max_bb, B) + 1):
        if B % bb == 0 and (B // bb) >= 2:
            best = bb
    return best


def multi_head_attention_packed(x, wqkv, wp, bp2d, *,
                                num_heads=NUM_HEADS, head_size=HEAD_SIZE):
    """x: (B, T, C) f32; wqkv: (C, 3*H*hs) bf16; wp: (H*hs, C) bf16; bp2d: (1, C) f32."""
    B, T, C = x.shape
    hhs = num_heads * head_size
    assert C == N_EMBD and T <= BLOCK_SIZE and hhs == C

    Bb = _pick_block_b(B)
    grid = (B // Bb,)

    kernel = functools.partial(_mha_kernel, num_heads=num_heads, head_size=head_size)

    return pl.pallas_call(
        kernel,
        out_shape=jax.ShapeDtypeStruct((B, T, C), jnp.float32),
        grid_spec=pltpu.PrefetchScalarGridSpec(
            num_scalar_prefetch=0,
            grid=grid,
            in_specs=[
                # Bb batch elements per step; (T, C) lane-dense tiles.
                pl.BlockSpec((Bb, T, C), lambda g: (g, 0, 0)),
                # Resident weights: constant index_map, single-buffered (no refetch).
                pl.BlockSpec((C, 3 * hhs), lambda g: (0, 0),
                             pipeline_mode=pl.Buffered(buffer_count=1)),
                pl.BlockSpec((hhs, C), lambda g: (0, 0),
                             pipeline_mode=pl.Buffered(buffer_count=1)),
                pl.BlockSpec((1, C), lambda g: (0, 0),
                             pipeline_mode=pl.Buffered(buffer_count=1)),
            ],
            out_specs=pl.BlockSpec((Bb, T, C), lambda g: (g, 0, 0)),
        ),
        compiler_params=pltpu.CompilerParams(
            dimension_semantics=("parallel",)),
    )(x, wqkv, wp, bp2d)


def multi_head_attention(x, wq, wk, wv, wp, bp):
    """Convenience wrapper with the original (unpacked) parameter layout."""
    wqkv, wp_bf, bp2d = pack_mha_params(wq, wk, wv, wp, bp)
    return multi_head_attention_packed(x, wqkv, wp_bf, bp2d)


# ---------------------------------------------------------------------------
# Pure-JAX reference (mirrors the PyTorch forward in eval mode, all f32)
# ---------------------------------------------------------------------------
def reference(x, wq, wk, wv, wp, bp):
    B, T, C = x.shape
    H, _, hs = wq.shape
    outs = []
    for h in range(H):
        q = x @ wq[h]
        k = x @ wk[h]
        v = x @ wv[h]
        wei = (q @ jnp.swapaxes(k, -2, -1)) * (hs ** -0.5)
        mask = jnp.tril(jnp.ones((T, T), dtype=bool))
        wei = jnp.where(mask, wei, -jnp.inf)
        wei = jax.nn.softmax(wei, axis=-1)
        outs.append(wei @ v)
    y = jnp.concatenate(outs, axis=-1)
    return y @ wp + bp


if __name__ == "__main__":
    key = jax.random.PRNGKey(0)
    kx, kq, kk, kv, kp, kb = jax.random.split(key, 6)

    B, T = 2, 8
    x = jax.random.normal(kx, (B, T, N_EMBD), dtype=jnp.float32)

    # Deterministic parameter init (PyTorch Linear-style uniform bounds).
    bound_in = 1.0 / (N_EMBD ** 0.5)
    wq = jax.random.uniform(kq, (NUM_HEADS, N_EMBD, HEAD_SIZE), jnp.float32,
                            -bound_in, bound_in)
    wk = jax.random.uniform(kk, (NUM_HEADS, N_EMBD, HEAD_SIZE), jnp.float32,
                            -bound_in, bound_in)
    wv = jax.random.uniform(kv, (NUM_HEADS, N_EMBD, HEAD_SIZE), jnp.float32,
                            -bound_in, bound_in)
    bound_p = 1.0 / ((NUM_HEADS * HEAD_SIZE) ** 0.5)
    wp = jax.random.uniform(kp, (NUM_HEADS * HEAD_SIZE, N_EMBD), jnp.float32,
                            -bound_p, bound_p)
    bp = jax.random.uniform(kb, (N_EMBD,), jnp.float32, -bound_p, bound_p)

    # Pack weights once (scale fold, head-stack, bf16 cast) outside the call path.
    wqkv, wp_bf, bp2d = pack_mha_params(wq, wk, wv, wp, bp)

    fwd = jax.jit(multi_head_attention_packed,
                  static_argnames=("num_heads", "head_size"))
    out = jax.block_until_ready(fwd(x, wqkv, wp_bf, bp2d))

    ref = reference(x, wq, wk, wv, wp, bp)
    assert out.shape == (B, T, N_EMBD)
    # Tolerance covers bf16 MXU operands (f32 accumulation) and the EUP
    # approximate-reciprocal softmax denominator; structural bugs would show
    # up as O(1) errors.
    assert jnp.allclose(out, ref, atol=2e-2, rtol=2e-2), "mismatch vs reference"
    print("KERNEL_OK")
</pallas_src>

<mosaic_0001>
module attributes {stable_mosaic.version = 11 : i64} {
  func.func @_mha_kernel(%arg0: i32, %arg1: memref<1x8x128xf32, #tpu.memory_space<vmem>>, %arg2: memref<128x384xbf16, #tpu.memory_space<vmem>>, %arg3: memref<128x128xbf16, #tpu.memory_space<vmem>>, %arg4: memref<1x128xf32, #tpu.memory_space<vmem>>, %arg5: memref<1x8x128xf32, #tpu.memory_space<vmem>>) attributes {dimension_semantics = [#tpu.dimension_semantics<parallel>], iteration_bounds = array<i64: 2>, scalar_prefetch = 0 : i64, scratch_operands = 0 : i64, tpu.core_type = #tpu.core_type<tc>, window_params = [{transform_indices = @transform_0, window_bounds = array<i64: 1, 8, 128>}, {pipeline_mode = #tpu.pipeline_mode<synchronous>, transform_indices = @transform_1, window_bounds = array<i64: 128, 384>}, {pipeline_mode = #tpu.pipeline_mode<synchronous>, transform_indices = @transform_2, window_bounds = array<i64: 128, 128>}, {pipeline_mode = #tpu.pipeline_mode<synchronous>, transform_indices = @transform_3, window_bounds = array<i64: 1, 128>}, {transform_indices = @transform_4, window_bounds = array<i64: 1, 8, 128>}]} {
    %c0 = arith.constant 0 : index
    %c0_0 = arith.constant 0 : index
    %0 = vector.load %arg2[%c0, %c0_0] : memref<128x384xbf16, #tpu.memory_space<vmem>>, vector<128x384xbf16>
    %c0_1 = arith.constant 0 : index
    %c0_2 = arith.constant 0 : index
    %1 = vector.load %arg3[%c0_1, %c0_2] : memref<128x128xbf16, #tpu.memory_space<vmem>>, vector<128x128xbf16>
    %c0_3 = arith.constant 0 : index
    %c0_4 = arith.constant 0 : index
    %2 = vector.load %arg4[%c0_3, %c0_4] : memref<1x128xf32, #tpu.memory_space<vmem>>, vector<1x128xf32>
    %3 = tpu.iota {dimensions = array<i32: 0>} : vector<8x8xi32>
    %4 = tpu.iota {dimensions = array<i32: 1>} : vector<8x8xi32>
    %5 = arith.cmpi sle, %4, %3 : vector<8x8xi32>
    %c0_5 = arith.constant 0 : index
    %c0_6 = arith.constant 0 : index
    %c0_7 = arith.constant 0 : index
    %6 = vector.load %arg1[%c0_5, %c0_6, %c0_7] : memref<1x8x128xf32, #tpu.memory_space<vmem>>, vector<1x8x128xf32>
    %7 = vector.shape_cast %6 : vector<1x8x128xf32> to vector<8x128xf32>
    %8 = arith.truncf %7 : vector<8x128xf32> to vector<8x128xbf16>
    %cst = arith.constant dense<0.000000e+00> : vector<8x384xf32>
    %9 = tpu.matmul %8, %0, %cst {dimension_numbers = #tpu.dot_dimension_numbers<[1], [0], [0], [1], [0, 0, 1, 1], [], []>} : vector<8x128xbf16>, vector<128x384xbf16>, vector<8x384xf32> -> vector<8x384xf32>
    %cst_8 = arith.constant 0.000000e+00 : f32
    %10 = vector.broadcast %cst_8 : f32 to vector<8x128xf32>
    %11 = vector.extract_strided_slice %9 {offsets = [0, 0], sizes = [8, 32], strides = [1, 1]} : vector<8x384xf32> to vector<8x32xf32>
    %12 = arith.truncf %11 : vector<8x32xf32> to vector<8x32xbf16>
    %13 = vector.extract_strided_slice %9 {offsets = [0, 128], sizes = [8, 32], strides = [1, 1]} : vector<8x384xf32> to vector<8x32xf32>
    %14 = arith.truncf %13 : vector<8x32xf32> to vector<8x32xbf16>
    %15 = vector.extract_strided_slice %9 {offsets = [0, 256], sizes = [8, 32], strides = [1, 1]} : vector<8x384xf32> to vector<8x32xf32>
    %16 = arith.truncf %15 : vector<8x32xf32> to vector<8x32xbf16>
    %cst_9 = arith.constant dense<0.000000e+00> : vector<8x8xf32>
    %17 = tpu.matmul %12, %14, %cst_9 {dimension_numbers = #tpu.dot_dimension_numbers<[1], [1], [0], [0], [0, 0, 1, 0], [], []>} : vector<8x32xbf16>, vector<8x32xbf16>, vector<8x8xf32> -> vector<8x8xf32>
    %cst_10 = arith.constant 0xFF800000 : f32
    %18 = vector.broadcast %cst_10 : f32 to vector<8x8xf32>
    %19 = arith.select %5, %17, %18 : vector<8x8xi1>, vector<8x8xf32>
    %cst_11 = arith.constant dense<0xFF800000> : vector<8xf32>
    %20 = vector.multi_reduction <maximumf>, %19, %cst_11 [1] : vector<8x8xf32> to vector<8xf32>
    %21 = vector.shape_cast %20 : vector<8xf32> to vector<8x1xf32>
    %22 = vector.broadcast %21 : vector<8x1xf32> to vector<8x8xf32>
    %23 = arith.subf %19, %22 : vector<8x8xf32>
    %24 = math.exp %23 : vector<8x8xf32>
    %cst_12 = arith.constant dense<0.000000e+00> : vector<8xf32>
    %25 = vector.multi_reduction <add>, %24, %cst_12 [1] : vector<8x8xf32> to vector<8xf32>
    %26 = vector.shape_cast %25 : vector<8xf32> to vector<8x1xf32>
    %27 = arith.truncf %24 : vector<8x8xf32> to vector<8x8xbf16>
    %cst_13 = arith.constant dense<0.000000e+00> : vector<8x32xf32>
    %28 = tpu.matmul %27, %16, %cst_13 {dimension_numbers = #tpu.dot_dimension_numbers<[1], [0], [0], [1], [0, 0, 1, 1], [], []>} : vector<8x8xbf16>, vector<8x32xbf16>, vector<8x32xf32> -> vector<8x32xf32>
    %29 = tpu.reciprocal %26 {approx = true} : vector<8x1xf32> -> vector<8x1xf32>
    %30 = vector.broadcast %29 : vector<8x1xf32> to vector<8x32xf32>
    %31 = arith.mulf %28, %30 : vector<8x32xf32>
    %32 = arith.truncf %31 : vector<8x32xf32> to vector<8x32xbf16>
    %33 = vector.extract_strided_slice %1 {offsets = [0, 0], sizes = [32, 128], strides = [1, 1]} : vector<128x128xbf16> to vector<32x128xbf16>
    %cst_14 = arith.constant dense<0.000000e+00> : vector<8x128xf32>
    %34 = tpu.matmul %32, %33, %cst_14 {dimension_numbers = #tpu.dot_dimension_numbers<[1], [0], [0], [1], [0, 0, 1, 1], [], []>} : vector<8x32xbf16>, vector<32x128xbf16>, vector<8x128xf32> -> vector<8x128xf32>
    %35 = arith.addf %10, %34 : vector<8x128xf32>
    %36 = vector.extract_strided_slice %9 {offsets = [0, 32], sizes = [8, 32], strides = [1, 1]} : vector<8x384xf32> to vector<8x32xf32>
    %37 = arith.truncf %36 : vector<8x32xf32> to vector<8x32xbf16>
    %38 = vector.extract_strided_slice %9 {offsets = [0, 160], sizes = [8, 32], strides = [1, 1]} : vector<8x384xf32> to vector<8x32xf32>
    %39 = arith.truncf %38 : vector<8x32xf32> to vector<8x32xbf16>
    %40 = vector.extract_strided_slice %9 {offsets = [0, 288], sizes = [8, 32], strides = [1, 1]} : vector<8x384xf32> to vector<8x32xf32>
    %41 = arith.truncf %40 : vector<8x32xf32> to vector<8x32xbf16>
    %cst_15 = arith.constant dense<0.000000e+00> : vector<8x8xf32>
    %42 = tpu.matmul %37, %39, %cst_15 {dimension_numbers = #tpu.dot_dimension_numbers<[1], [1], [0], [0], [0, 0, 1, 0], [], []>} : vector<8x32xbf16>, vector<8x32xbf16>, vector<8x8xf32> -> vector<8x8xf32>
    %cst_16 = arith.constant 0xFF800000 : f32
    %43 = vector.broadcast %cst_16 : f32 to vector<8x8xf32>
    %44 = arith.select %5, %42, %43 : vector<8x8xi1>, vector<8x8xf32>
    %cst_17 = arith.constant dense<0xFF800000> : vector<8xf32>
    %45 = vector.multi_reduction <maximumf>, %44, %cst_17 [1] : vector<8x8xf32> to vector<8xf32>
    %46 = vector.shape_cast %45 : vector<8xf32> to vector<8x1xf32>
    %47 = vector.broadcast %46 : vector<8x1xf32> to vector<8x8xf32>
    %48 = arith.subf %44, %47 : vector<8x8xf32>
    %49 = math.exp %48 : vector<8x8xf32>
    %cst_18 = arith.constant dense<0.000000e+00> : vector<8xf32>
    %50 = vector.multi_reduction <add>, %49, %cst_18 [1] : vector<8x8xf32> to vector<8xf32>
    %51 = vector.shape_cast %50 : vector<8xf32> to vector<8x1xf32>
    %52 = arith.truncf %49 : vector<8x8xf32> to vector<8x8xbf16>
    %cst_19 = arith.constant dense<0.000000e+00> : vector<8x32xf32>
    %53 = tpu.matmul %52, %41, %cst_19 {dimension_numbers = #tpu.dot_dimension_numbers<[1], [0], [0], [1], [0, 0, 1, 1], [], []>} : vector<8x8xbf16>, vector<8x32xbf16>, vector<8x32xf32> -> vector<8x32xf32>
    %54 = tpu.reciprocal %51 {approx = true} : vector<8x1xf32> -> vector<8x1xf32>
    %55 = vector.broadcast %54 : vector<8x1xf32> to vector<8x32xf32>
    %56 = arith.mulf %53, %55 : vector<8x32xf32>
    %57 = arith.truncf %56 : vector<8x32xf32> to vector<8x32xbf16>
    %58 = vector.extract_strided_slice %1 {offsets = [32, 0], sizes = [32, 128], strides = [1, 1]} : vector<128x128xbf16> to vector<32x128xbf16>
    %cst_20 = arith.constant dense<0.000000e+00> : vector<8x128xf32>
    %59 = tpu.matmul %57, %58, %cst_20 {dimension_numbers = #tpu.dot_dimension_numbers<[1], [0], [0], [1], [0, 0, 1, 1], [], []>} : vector<8x32xbf16>, vector<32x128xbf16>, vector<8x128xf32> -> vector<8x128xf32>
    %60 = arith.addf %35, %59 : vector<8x128xf32>
    %61 = vector.extract_strided_slice %9 {offsets = [0, 64], sizes = [8, 32], strides = [1, 1]} : vector<8x384xf32> to vector<8x32xf32>
    %62 = arith.truncf %61 : vector<8x32xf32> to vector<8x32xbf16>
    %63 = vector.extract_strided_slice %9 {offsets = [0, 192], sizes = [8, 32], strides = [1, 1]} : vector<8x384xf32> to vector<8x32xf32>
    %64 = arith.truncf %63 : vector<8x32xf32> to vector<8x32xbf16>
    %65 = vector.extract_strided_slice %9 {offsets = [0, 320], sizes = [8, 32], strides = [1, 1]} : vector<8x384xf32> to vector<8x32xf32>
    %66 = arith.truncf %65 : vector<8x32xf32> to vector<8x32xbf16>
    %cst_21 = arith.constant dense<0.000000e+00> : vector<8x8xf32>
    %67 = tpu.matmul %62, %64, %cst_21 {dimension_numbers = #tpu.dot_dimension_numbers<[1], [1], [0], [0], [0, 0, 1, 0], [], []>} : vector<8x32xbf16>, vector<8x32xbf16>, vector<8x8xf32> -> vector<8x8xf32>
    %cst_22 = arith.constant 0xFF800000 : f32
    %68 = vector.broadcast %cst_22 : f32 to vector<8x8xf32>
    %69 = arith.select %5, %67, %68 : vector<8x8xi1>, vector<8x8xf32>
    %cst_23 = arith.constant dense<0xFF800000> : vector<8xf32>
    %70 = vector.multi_reduction <maximumf>, %69, %cst_23 [1] : vector<8x8xf32> to vector<8xf32>
    %71 = vector.shape_cast %70 : vector<8xf32> to vector<8x1xf32>
    %72 = vector.broadcast %71 : vector<8x1xf32> to vector<8x8xf32>
    %73 = arith.subf %69, %72 : vector<8x8xf32>
    %74 = math.exp %73 : vector<8x8xf32>
    %cst_24 = arith.constant dense<0.000000e+00> : vector<8xf32>
    %75 = vector.multi_reduction <add>, %74, %cst_24 [1] : vector<8x8xf32> to vector<8xf32>
    %76 = vector.shape_cast %75 : vector<8xf32> to vector<8x1xf32>
    %77 = arith.truncf %74 : vector<8x8xf32> to vector<8x8xbf16>
    %cst_25 = arith.constant dense<0.000000e+00> : vector<8x32xf32>
    %78 = tpu.matmul %77, %66, %cst_25 {dimension_numbers = #tpu.dot_dimension_numbers<[1], [0], [0], [1], [0, 0, 1, 1], [], []>} : vector<8x8xbf16>, vector<8x32xbf16>, vector<8x32xf32> -> vector<8x32xf32>
    %79 = tpu.reciprocal %76 {approx = true} : vector<8x1xf32> -> vector<8x1xf32>
    %80 = vector.broadcast %79 : vector<8x1xf32> to vector<8x32xf32>
    %81 = arith.mulf %78, %80 : vector<8x32xf32>
    %82 = arith.truncf %81 : vector<8x32xf32> to vector<8x32xbf16>
    %83 = vector.extract_strided_slice %1 {offsets = [64, 0], sizes = [32, 128], strides = [1, 1]} : vector<128x128xbf16> to vector<32x128xbf16>
    %cst_26 = arith.constant dense<0.000000e+00> : vector<8x128xf32>
    %84 = tpu.matmul %82, %83, %cst_26 {dimension_numbers = #tpu.dot_dimension_numbers<[1], [0], [0], [1], [0, 0, 1, 1], [], []>} : vector<8x32xbf16>, vector<32x128xbf16>, vector<8x128xf32> -> vector<8x128xf32>
    %85 = arith.addf %60, %84 : vector<8x128xf32>
    %86 = vector.extract_strided_slice %9 {offsets = [0, 96], sizes = [8, 32], strides = [1, 1]} : vector<8x384xf32> to vector<8x32xf32>
    %87 = arith.truncf %86 : vector<8x32xf32> to vector<8x32xbf16>
    %88 = vector.extract_strided_slice %9 {offsets = [0, 224], sizes = [8, 32], strides = [1, 1]} : vector<8x384xf32> to vector<8x32xf32>
    %89 = arith.truncf %88 : vector<8x32xf32> to vector<8x32xbf16>
    %90 = vector.extract_strided_slice %9 {offsets = [0, 352], sizes = [8, 32], strides = [1, 1]} : vector<8x384xf32> to vector<8x32xf32>
    %91 = arith.truncf %90 : vector<8x32xf32> to vector<8x32xbf16>
    %cst_27 = arith.constant dense<0.000000e+00> : vector<8x8xf32>
    %92 = tpu.matmul %87, %89, %cst_27 {dimension_numbers = #tpu.dot_dimension_numbers<[1], [1], [0], [0], [0, 0, 1, 0], [], []>} : vector<8x32xbf16>, vector<8x32xbf16>, vector<8x8xf32> -> vector<8x8xf32>
    %cst_28 = arith.constant 0xFF800000 : f32
    %93 = vector.broadcast %cst_28 : f32 to vector<8x8xf32>
    %94 = arith.select %5, %92, %93 : vector<8x8xi1>, vector<8x8xf32>
    %cst_29 = arith.constant dense<0xFF800000> : vector<8xf32>
    %95 = vector.multi_reduction <maximumf>, %94, %cst_29 [1] : vector<8x8xf32> to vector<8xf32>
    %96 = vector.shape_cast %95 : vector<8xf32> to vector<8x1xf32>
    %97 = vector.broadcast %96 : vector<8x1xf32> to vector<8x8xf32>
    %98 = arith.subf %94, %97 : vector<8x8xf32>
    %99 = math.exp %98 : vector<8x8xf32>
    %cst_30 = arith.constant dense<0.000000e+00> : vector<8xf32>
    %100 = vector.multi_reduction <add>, %99, %cst_30 [1] : vector<8x8xf32> to vector<8xf32>
    %101 = vector.shape_cast %100 : vector<8xf32> to vector<8x1xf32>
    %102 = arith.truncf %99 : vector<8x8xf32> to vector<8x8xbf16>
    %cst_31 = arith.constant dense<0.000000e+00> : vector<8x32xf32>
    %103 = tpu.matmul %102, %91, %cst_31 {dimension_numbers = #tpu.dot_dimension_numbers<[1], [0], [0], [1], [0, 0, 1, 1], [], []>} : vector<8x8xbf16>, vector<8x32xbf16>, vector<8x32xf32> -> vector<8x32xf32>
    %104 = tpu.reciprocal %101 {approx = true} : vector<8x1xf32> -> vector<8x1xf32>
    %105 = vector.broadcast %104 : vector<8x1xf32> to vector<8x32xf32>
    %106 = arith.mulf %103, %105 : vector<8x32xf32>
    %107 = arith.truncf %106 : vector<8x32xf32> to vector<8x32xbf16>
    %108 = vector.extract_strided_slice %1 {offsets = [96, 0], sizes = [32, 128], strides = [1, 1]} : vector<128x128xbf16> to vector<32x128xbf16>
    %cst_32 = arith.constant dense<0.000000e+00> : vector<8x128xf32>
    %109 = tpu.matmul %107, %108, %cst_32 {dimension_numbers = #tpu.dot_dimension_numbers<[1], [0], [0], [1], [0, 0, 1, 1], [], []>} : vector<8x32xbf16>, vector<32x128xbf16>, vector<8x128xf32> -> vector<8x128xf32>
    %110 = arith.addf %85, %109 : vector<8x128xf32>
    %111 = vector.broadcast %2 : vector<1x128xf32> to vector<8x128xf32>
    %112 = arith.addf %110, %111 : vector<8x128xf32>
    %c0_33 = arith.constant 0 : index
    %c0_34 = arith.constant 0 : index
    %c0_35 = arith.constant 0 : index
    %113 = vector.load %arg5[%c0_33, %c0_34, %c0_35] : memref<1x8x128xf32, #tpu.memory_space<vmem>>, vector<1x8x128xf32>
    %114 = vector.shape_cast %113 : vector<1x8x128xf32> to vector<8x128xf32>
    %115 = vector.shape_cast %112 : vector<8x128xf32> to vector<1x8x128xf32>
    tpu.vector_store %arg5[%c0_33, %c0_34, %c0_35], %115 {strides = array<i32>} : memref<1x8x128xf32, #tpu.memory_space<vmem>>, vector<1x8x128xf32>,
    return
  }
  func.func @transform_0(%arg0: i32) -> (i32, i32, i32) {
    %c0_i32 = arith.constant 0 : i32
    %c0_i32_0 = arith.constant 0 : i32
    %c0_i32_1 = arith.constant 0 : i32
    return %arg0, %c0_i32, %c0_i32_0 : i32, i32, i32
  }
  func.func @transform_1(%arg0: i32) -> (i32, i32) {
    %c0_i32 = arith.constant 0 : i32
    %c0_i32_0 = arith.constant 0 : i32
    %c0_i32_1 = arith.constant 0 : i32
    return %c0_i32, %c0_i32_0 : i32, i32
  }
  func.func @transform_2(%arg0: i32) -> (i32, i32) {
    %c0_i32 = arith.constant 0 : i32
    %c0_i32_0 = arith.constant 0 : i32
    %c0_i32_1 = arith.constant 0 : i32
    return %c0_i32, %c0_i32_0 : i32, i32
  }
  func.func @transform_3(%arg0: i32) -> (i32, i32) {
    %c0_i32 = arith.constant 0 : i32
    %c0_i32_0 = arith.constant 0 : i32
    %c0_i32_1 = arith.constant 0 : i32
    return %c0_i32, %c0_i32_0 : i32, i32
  }
  func.func @transform_4(%arg0: i32) -> (i32, i32, i32) {
    %c0_i32 = arith.constant 0 : i32
    %c0_i32_0 = arith.constant 0 : i32
    %c0_i32_1 = arith.constant 0 : i32
    return %arg0, %c0_i32, %c0_i32_0 : i32, i32, i32
  }
}

</mosaic_0001>

<llo_original>
// kernel: multi_head_attention_packed.1
$region0: #{multi_head_attention_packed.1}
  #allocation0 [shape = 'u32[]', space=smem, size = 0x4, offset = 0x4, fixed_abs, tag = 'smem constant byte address 0x4 - core index']
  #allocation1 [shape = 'u32[72,128]{1,0:T(1,128)}', space=vmem, size = 0x9000, scoped, tag = 'internal scratch']
  %s0 = inlined_call_operand.hbm [shape: f32[2,8,128], index: 0, kind: input, shape index: {}]
  %s1 = inlined_call_operand.hbm [shape: bf16[128,384], index: 1, kind: input, shape index: {}]
  %s2 = inlined_call_operand.hbm [shape: bf16[128,128], index: 2, kind: input, shape index: {}]
  %s3 = inlined_call_operand.vmem [shape: f32[1,128], index: 3, kind: input, shape index: {}]
  %s4 = inlined_call_operand.hbm [shape: f32[2,8,128], index: 4, kind: output, shape index: {}]
  %s5 = sld [smem:[#allocation0]]
  $region61: #{multi_head_attention_packed.1} parent=0
    _
  %s7 = ssub.s32 1, %s5
  %s8 = scalar_select 0, %s7, %s5
  $region1: #{multi_head_attention_packed.1} parent=0
    #allocation2 [shape = 'u8[8192]{0}', space=vmem, size = 0x2000, scoped, tag = 'input window, operand 0']
    #allocation3 [shape = 's32[2]{0}', space=sflag, size = 0x8, scoped, tag = 'scoped memory for multi_head_attention_packed.1']
    #allocation4 [shape = 's32[2]{0}', space=sflag, size = 0x8, scoped, tag = 'scoped memory for multi_head_attention_packed.1']
    #allocation5 [shape = 'u8[98304]{0}', space=vmem, size = 0x18000, scoped, tag = 'input window, operand 1, single buffered']
    #allocation6 [shape = 's32[1]{0}', space=sflag, size = 0x4, scoped, tag = 'scoped memory for multi_head_attention_packed.1']
    #allocation7 [shape = 'u8[32768]{0}', space=vmem, size = 0x8000, scoped, tag = 'input window, operand 2, single buffered']
    #allocation8 [shape = 'u8[8192]{0}', space=vmem, size = 0x2000, scoped, tag = 'output window, operand 0']
    %9 = vsyncpa [#allocation3], 0
    %s10 = scalar_lea.sflag [#allocation3], 1
    %11 = vsyncpa %s10, 0
    %12 = vsyncpa [#allocation6], 0
    %13 = vsyncpa [#allocation4], 0
    %s14 = scalar_lea.sflag [#allocation4], 1
    %15 = vsyncpa %s14, 0
    loop: start=0, step=1, limit=4
    $region2: #{multi_head_attention_packed.1} parent=1 // loop_pre_header
      _
    $region3: #{multi_head_attention_packed.1} parent=1 // loop_header
      %s17 = sphi 0, %s21
      %p18 = scmp.ge.s32.totalorder %s17, 4
      %s27 = sphi 0, %s29
      %s30 = sphi 0, %s27
      %s31 = sphi 0, %s30
      %s47 = sphi 0, %s31
      %s51 = sphi 0, %s51
      %s53 = sphi 0, %s51
      %s54 = sphi 0, %s53
      %s68 = sphi 0, %s54
      %s72 = sphi 0, %s72
      %s74 = sphi 0, %s72
      %s75 = sphi 0, %s74
      %s89 = sphi 0, %s75
      %s93 = sphi 0, %s93
      %s95 = sphi 0, %s93
      %s96 = sphi 0, %s95
      %s110 = sphi 0, %s96
      %s116 = sphi 0, %s118
      %s119 = sphi 0, %s116
      %s120 = sphi 0, %s119
      %s136 = sphi 0, %s120
    $region4: #{multi_head_attention_packed.1} parent=1 // loop_header_branch
      %20 = sbr.rel (%p18) target = $region8
    $region5: #{multi_head_attention_packed.1} parent=1 // loop_body
      %s22 = ssub.s32 %s17, 1
      %s23 = ssub.s32 %s17, 2
      %s24 = sadd.s32 %s17, 1
      %s25 = ssub.s32 %s17, %s24
      %p26 = scmp.eq.s32.totalorder %s25, 0
      %s28 = sadd.s32 %s27, 1
      %s29 = scalar_select %p26, %s27, %s28
      %p32 = pneg %p26
      %p33 = scmp.eq.s32.totalorder %s17, 1
      %p34 = por %p32, %p33
      %p35 = scmp.ne.s32.totalorder %s27, %s30
      %p36 = scmp.eq.s32.totalorder %s17, 0
      %p37 = por %p35, %p36
      %p38 = scmp.ne.s32.totalorder %s27, %s30
      %p39 = scmp.eq.s32.totalorder %s22, 1
      %p40 = por %p38, %p39
      %p41 = scmp.ne.s32.totalorder %s30, %s31
      %p42 = scmp.eq.s32.totalorder %s22, 0
      %p43 = por %p41, %p42
      %p44 = scmp.ne.s32.totalorder %s30, %s31
      %p45 = scmp.eq.s32.totalorder %s23, 1
      %p46 = por %p44, %p45
      %p48 = scmp.ne.s32.totalorder %s31, %s47
      %p49 = scmp.eq.s32.totalorder %s23, 0
      %p50 = por %p48, %p49
      %s52 = sadd.s32 %s51, 1
      %p55 = scmp.eq.s32.totalorder %s17, 1
      %p56 = scmp.ne.s32.totalorder %s51, %s53
      %p57 = scmp.eq.s32.totalorder %s17, 0
      %p58 = por %p56, %p57
      %p59 = scmp.ne.s32.totalorder %s51, %s53
      %p60 = scmp.eq.s32.totalorder %s22, 1
      %p61 = por %p59, %p60
      %p62 = scmp.ne.s32.totalorder %s53, %s54
      %p63 = scmp.eq.s32.totalorder %s22, 0
      %p64 = por %p62, %p63
      %p65 = scmp.ne.s32.totalorder %s53, %s54
      %p66 = scmp.eq.s32.totalorder %s23, 1
      %p67 = por %p65, %p66
      %p69 = scmp.ne.s32.totalorder %s54, %s68
      %p70 = scmp.eq.s32.totalorder %s23, 0
      %p71 = por %p69, %p70
      %s73 = sadd.s32 %s72, 1
      %p76 = scmp.eq.s32.totalorder %s17, 1
      %p77 = scmp.ne.s32.totalorder %s72, %s74
      %p78 = scmp.eq.s32.totalorder %s17, 0
      %p79 = por %p77, %p78
      %p80 = scmp.ne.s32.totalorder %s72, %s74
      %p81 = scmp.eq.s32.totalorder %s22, 1
      %p82 = por %p80, %p81
      %p83 = scmp.ne.s32.totalorder %s74, %s75
      %p84 = scmp.eq.s32.totalorder %s22, 0
      %p85 = por %p83, %p84
      %p86 = scmp.ne.s32.totalorder %s74, %s75
      %p87 = scmp.eq.s32.totalorder %s23, 1
      %p88 = por %p86, %p87
      %p90 = scmp.ne.s32.totalorder %s75, %s89
      %p91 = scmp.eq.s32.totalorder %s23, 0
      %p92 = por %p90, %p91
      %s94 = sadd.s32 %s93, 1
      %p97 = scmp.eq.s32.totalorder %s17, 1
      %p98 = scmp.ne.s32.totalorder %s93, %s95
      %p99 = scmp.eq.s32.totalorder %s17, 0
      %p100 = por %p98, %p99
      %p101 = scmp.ne.s32.totalorder %s93, %s95
      %p102 = scmp.eq.s32.totalorder %s22, 1
      %p103 = por %p101, %p102
      %p104 = scmp.ne.s32.totalorder %s95, %s96
      %p105 = scmp.eq.s32.totalorder %s22, 0
      %p106 = por %p104, %p105
      %p107 = scmp.ne.s32.totalorder %s95, %s96
      %p108 = scmp.eq.s32.totalorder %s23, 1
      %p109 = por %p107, %p108
      %p111 = scmp.ne.s32.totalorder %s96, %s110
      %p112 = scmp.eq.s32.totalorder %s23, 0
      %p113 = por %p111, %p112
      %s114 = ssub.s32 %s17, %s24
      %p115 = scmp.eq.s32.totalorder %s114, 0
      %s117 = sadd.s32 %s116, 1
      %s118 = scalar_select %p115, %s116, %s117
      %p121 = pneg %p115
      %p122 = scmp.eq.s32.totalorder %s17, 1
      %p123 = por %p121, %p122
      %p124 = scmp.ne.s32.totalorder %s116, %s119
      %p125 = scmp.eq.s32.totalorder %s17, 0
      %p126 = por %p124, %p125
      %p127 = scmp.ne.s32.totalorder %s116, %s119
      %p128 = scmp.eq.s32.totalorder %s22, 1
      %p129 = por %p127, %p128
      %p130 = scmp.ne.s32.totalorder %s119, %s120
      %p131 = scmp.eq.s32.totalorder %s22, 0
      %p132 = por %p130, %p131
      %p133 = scmp.ne.s32.totalorder %s119, %s120
      %p134 = scmp.eq.s32.totalorder %s23, 1
      %p135 = por %p133, %p134
      %p137 = scmp.ne.s32.totalorder %s120, %s136
      %p138 = scmp.eq.s32.totalorder %s23, 0
      %p139 = por %p137, %p138
      %p140 = scmp.le.s32.totalorder 1, %s17
      %p141 = scmp.lt.s32.totalorder %s17, 3
      %p142 = pnand %p140, %p141
      %p143 = pneg %p142
      // Predicated region
      $region9: #{multi_head_attention_packed.1} parent=5 // pred_check
        _
      $region10: #{multi_head_attention_packed.1} parent=5 // pred_check_branch
        %145 = sbr.rel (%p142) target = $region12
      $region11: #{multi_head_attention_packed.1} parent=5 // pred_region
        %s146 = ssub.s32 %s17, 1
        // Predicated region
        $region13: #{multi_head_attention_packed.1} parent=11 // pred_check
          %p147 = pneg %p64
        $region14: #{multi_head_attention_packed.1} parent=11 // pred_check_branch
          %149 = sbr.rel (%p147) target = $region16
        $region15: #{multi_head_attention_packed.1} parent=11 // pred_region
          %151 = vsyncadd [#allocation6], 0
          %s152 = sshll.u32 %s1, 4
          %s153 = int_to_ptr.hbm [resolvable:$true] %s152
          %s154 = sshll.u32 [#allocation5], 4
          %s155 = int_to_ptr.vmem [resolvable:$true] %s154
          %160 = dma.hbm_to_vmem [thread:$0]  %s153, 3072, %s155, [#allocation6], 192, 192, 12
        $region16: #{multi_head_attention_packed.1} parent=11 // pred_fallthru
          _
        // Predicated region
        $region17: #{multi_head_attention_packed.1} parent=11 // pred_check
          %p161 = pneg %p85
        $region18: #{multi_head_attention_packed.1} parent=11 // pred_check_branch
          %163 = sbr.rel (%p161) target = $region20
        $region19: #{multi_head_attention_packed.1} parent=11 // pred_region
          %165 = vsyncadd [#allocation6], 0
          %s166 = sshll.u32 %s2, 4
          %s167 = int_to_ptr.hbm [resolvable:$true] %s166
          %s168 = sshll.u32 [#allocation7], 4
          %s169 = int_to_ptr.vmem [resolvable:$true] %s168
          %174 = dma.hbm_to_vmem [thread:$0]  %s167, 1024, %s169, [#allocation6], 64, 64, 4
        $region20: #{multi_head_attention_packed.1} parent=11 // pred_fallthru
          _
        // Predicated region
        $region21: #{multi_head_attention_packed.1} parent=11 // pred_check
          %p175 = pneg %p106
        $region22: #{multi_head_attention_packed.1} parent=11 // pred_check_branch
          %177 = sbr.rel (%p175) target = $region24
        $region23: #{multi_head_attention_packed.1} parent=11 // pred_region
          _
        $region24: #{multi_head_attention_packed.1} parent=11 // pred_fallthru
          _
      $region12: #{multi_head_attention_packed.1} parent=5 // pred_fallthru
        _
      %p178 = scmp.lt.s32.totalorder %s17, 2
      // Predicated region
      $region25: #{multi_head_attention_packed.1} parent=5 // pred_check
        %p179 = pneg %p178
      $region26: #{multi_head_attention_packed.1} parent=5 // pred_check_branch
        %181 = sbr.rel (%p179) target = $region28
      $region27: #{multi_head_attention_packed.1} parent=5 // pred_region
        // Predicated region
        $region29: #{multi_head_attention_packed.1} parent=27 // pred_check
          %p182 = pneg %p37
        $region30: #{multi_head_attention_packed.1} parent=27 // pred_check_branch
          %184 = sbr.rel (%p182) target = $region32
        $region31: #{multi_head_attention_packed.1} parent=27 // pred_region
          %s185 = sand.u32 %s27, 1
          %s186 = scalar_lea.sflag [#allocation3], %s185
          %s187 = sand.u32 %s27, 1
          %s188 = smul.addr %s187, 8
          %s189 = scalar_lea.vmem [#allocation2], %s188
          %191 = vsyncadd %s186, 0
          %s192 = smul.addr %s17, 8
          %s193 = scalar_lea.hbm %s0, %s192
          %s195 = sshll.u32 %s193, 4
          %s196 = int_to_ptr.hbm [resolvable:$true] %s195
          %s197 = sshll.u32 %s189, 4
          %s198 = int_to_ptr.vmem [resolvable:$true] %s197
          %200 = dma.hbm_to_vmem [thread:$0]  %s196, 128, %s198, %s186
        $region32: #{multi_head_attention_packed.1} parent=27 // pred_fallthru
          _
      $region28: #{multi_head_attention_packed.1} parent=5 // pred_fallthru
        _
      %p201 = scmp.le.s32.totalorder 1, %s17
      %p202 = scmp.lt.s32.totalorder %s17, 3
      %p203 = pnand %p201, %p202
      %p204 = pneg %p203
      // Predicated region
      $region33: #{multi_head_attention_packed.1} parent=5 // pred_check
        _
      $region34: #{multi_head_attention_packed.1} parent=5 // pred_check_branch
        %206 = sbr.rel (%p203) target = $region36
      $region35: #{multi_head_attention_packed.1} parent=5 // pred_region
        %s207 = ssub.s32 %s17, 1
        %s208 = sand.u32 %s30, 1
        %s209 = scalar_lea.sflag [#allocation3], %s208
        %s210 = sand.u32 %s30, 1
        %s211 = smul.addr %s210, 8
        %s212 = scalar_lea.vmem [#allocation2], %s211
        // Predicated region
        $region37: #{multi_head_attention_packed.1} parent=35 // pred_check
          %p213 = pneg %p43
        $region38: #{multi_head_attention_packed.1} parent=35 // pred_check_branch
          %215 = sbr.rel (%p213) target = $region40
        $region39: #{multi_head_attention_packed.1} parent=35 // pred_region
          %217 = dma.done %s209, 128
        $region40: #{multi_head_attention_packed.1} parent=35 // pred_fallthru
          _
        // Predicated region
        $region41: #{multi_head_attention_packed.1} parent=35 // pred_check
          %p218 = pneg %p64
        $region42: #{multi_head_attention_packed.1} parent=35 // pred_check_branch
          %220 = sbr.rel (%p218) target = $region44
        $region43: #{multi_head_attention_packed.1} parent=35 // pred_region
          %222 = dma.done [#allocation6], 3072
        $region44: #{multi_head_attention_packed.1} parent=35 // pred_fallthru
          _
        // Predicated region
        $region45: #{multi_head_attention_packed.1} parent=35 // pred_check
          %p223 = pneg %p85
        $region46: #{multi_head_attention_packed.1} parent=35 // pred_check_branch
          %225 = sbr.rel (%p223) target = $region48
        $region47: #{multi_head_attention_packed.1} parent=35 // pred_region
          %227 = dma.done [#allocation6], 1024
        $region48: #{multi_head_attention_packed.1} parent=35 // pred_fallthru
          _
        %s228 = sand.u32 %s30, 1
        %s229 = scalar_lea.sflag [#allocation3], %s228
        %s230 = sand.u32 %s30, 1
        %s231 = smul.addr %s230, 8
        %s232 = scalar_lea.vmem [#allocation2], %s231
        %p233 = pneg %p43
        %p234 = pneg %p40
        %p235 = pneg %p64
        %p236 = pneg %p61
        %p237 = pneg %p85
        %p238 = pneg %p82
        %p239 = pneg %p106
        %p240 = pneg %p103
        %p241 = pneg %p132
        %p242 = pneg %p129
        %s243 = sand.u32 %s119, 1
        %s244 = scalar_lea.sflag [#allocation4], %s243
        %s245 = sand.u32 %s119, 1
        %s246 = smul.addr %s245, 8
        %s247 = scalar_lea.vmem [#allocation8], %s246
        %v249 = vld [vmem:[#allocation5] sm:$0xff]
        %v250 = vld [vmem:[#allocation5 + $0x8] sm:$0xf]
        %v251 = vld [vmem:[#allocation5 + $0xc] sm:$0xff]
        %v252 = vld [vmem:[#allocation5 + $0x14] sm:$0xf]
        %v253 = vld [vmem:[#allocation5 + $0x18] sm:$0xff]
        %v254 = vld [vmem:[#allocation5 + $0x20] sm:$0xf]
        %v255 = vld [vmem:[#allocation5 + $0x24] sm:$0xff]
        %v256 = vld [vmem:[#allocation5 + $0x2c] sm:$0xf]
        %v257 = vld [vmem:[#allocation5 + $0x30] sm:$0xff]
        %v258 = vld [vmem:[#allocation5 + $0x38] sm:$0xf]
        %v259 = vld [vmem:[#allocation5 + $0x3c] sm:$0xff]
        %v260 = vld [vmem:[#allocation5 + $0x44] sm:$0xf]
        %v261 = vld [vmem:[#allocation5 + $0x48] sm:$0xff]
        %v262 = vld [vmem:[#allocation5 + $0x50] sm:$0xf]
        %v263 = vld [vmem:[#allocation5 + $0x54] sm:$0xff]
        %v264 = vld [vmem:[#allocation5 + $0x5c] sm:$0xf]
        %v265 = vld [vmem:[#allocation5 + $0x60] sm:$0xff]
        %v266 = vld [vmem:[#allocation5 + $0x68] sm:$0xf]
        %v267 = vld [vmem:[#allocation5 + $0x6c] sm:$0xff]
        %v268 = vld [vmem:[#allocation5 + $0x74] sm:$0xf]
        %v269 = vld [vmem:[#allocation5 + $0x78] sm:$0xff]
        %v270 = vld [vmem:[#allocation5 + $0x80] sm:$0xf]
        %v271 = vld [vmem:[#allocation5 + $0x84] sm:$0xff]
        %v272 = vld [vmem:[#allocation5 + $0x8c] sm:$0xf]
        %v273 = vld [vmem:[#allocation5 + $0x90] sm:$0xff]
        %v274 = vld [vmem:[#allocation5 + $0x98] sm:$0xf]
        %v275 = vld [vmem:[#allocation5 + $0x9c] sm:$0xff]
        %v276 = vld [vmem:[#allocation5 + $0xa4] sm:$0xf]
        %v277 = vld [vmem:[#allocation5 + $0xa8] sm:$0xff]
        %v278 = vld [vmem:[#allocation5 + $0xb0] sm:$0xf]
        %v279 = vld [vmem:[#allocation5 + $0xb4] sm:$0xff]
        %v280 = vld [vmem:[#allocation5 + $0xbc] sm:$0xf]
        %v281 = vld [vmem:[#allocation7] sm:$0xf]
        %v282 = vld [vmem:[#allocation7 + $0x4] sm:$0xf]
        %v283 = vld [vmem:[#allocation7 + $0x8] sm:$0xf]
        %v284 = vld [vmem:[#allocation7 + $0xc] sm:$0xf]
        %v285 = vld [vmem:[#allocation7 + $0x10] sm:$0xf]
        %v286 = vld [vmem:[#allocation7 + $0x14] sm:$0xf]
        %v287 = vld [vmem:[#allocation7 + $0x18] sm:$0xf]
        %v288 = vld [vmem:[#allocation7 + $0x1c] sm:$0xf]
        %v289 = vld [vmem:[#allocation7 + $0x20] sm:$0xf]
        %v290 = vld [vmem:[#allocation7 + $0x24] sm:$0xf]
        %v291 = vld [vmem:[#allocation7 + $0x28] sm:$0xf]
        %v292 = vld [vmem:[#allocation7 + $0x2c] sm:$0xf]
        %v293 = vld [vmem:[#allocation7 + $0x30] sm:$0xf]
        %v294 = vld [vmem:[#allocation7 + $0x34] sm:$0xf]
        %v295 = vld [vmem:[#allocation7 + $0x38] sm:$0xf]
        %v296 = vld [vmem:[#allocation7 + $0x3c] sm:$0xf]
        %v297 = vld [vmem:[%s3] sm:$0x1]
        %v298 = vlaneseq
        %v299 = vshrl.u32 %v298, 7
        %v300 = vlaneseq
        %v301 = vand.u32 %v300, 127
        %vm302 = vcmp.le.s32.totalorder %v301, %v299
        %v303 = vld [vmem:[%s212] sm:$0xff]
        %v304 = vpack.c.bf16 %v303, %v303
        %v337 = vunpack.c.l.b16 %v249
        %v338 = vunpack.c.h.b16 %v249
        %v339 = vunpack.c.l.b16 %v250
        %v340 = vunpack.c.l.b16 %v251
        %v341 = vunpack.c.h.b16 %v251
        %v342 = vunpack.c.l.b16 %v252
        %v343 = vunpack.c.l.b16 %v253
        %v344 = vunpack.c.h.b16 %v253
        %v345 = vunpack.c.l.b16 %v254
        %v346 = vunpack.c.l.b16 %v255
        %v347 = vunpack.c.h.b16 %v255
        %v348 = vunpack.c.l.b16 %v256
        %v349 = vunpack.c.l.b16 %v257
        %v350 = vunpack.c.h.b16 %v257
        %v351 = vunpack.c.l.b16 %v258
        %v352 = vunpack.c.l.b16 %v259
        %v353 = vunpack.c.h.b16 %v259
        %v354 = vunpack.c.l.b16 %v260
        %v355 = vunpack.c.l.b16 %v261
        %v356 = vunpack.c.h.b16 %v261
        %v357 = vunpack.c.l.b16 %v262
        %v358 = vunpack.c.l.b16 %v263
        %v359 = vunpack.c.h.b16 %v263
        %v360 = vunpack.c.l.b16 %v264
        %v361 = vunpack.c.l.b16 %v265
        %v362 = vunpack.c.h.b16 %v265
        %v363 = vunpack.c.l.b16 %v266
        %v364 = vunpack.c.l.b16 %v267
        %v365 = vunpack.c.h.b16 %v267
        %v366 = vunpack.c.l.b16 %v268
        %v367 = vunpack.c.l.b16 %v269
        %v368 = vunpack.c.h.b16 %v269
        %v369 = vunpack.c.l.b16 %v270
        %v370 = vunpack.c.l.b16 %v271
        %v371 = vunpack.c.h.b16 %v271
        %v372 = vunpack.c.l.b16 %v272
        %v373 = vunpack.c.l.b16 %v273
        %v374 = vunpack.c.h.b16 %v273
        %v375 = vunpack.c.l.b16 %v274
        %v376 = vunpack.c.l.b16 %v275
        %v377 = vunpack.c.h.b16 %v275
        %v378 = vunpack.c.l.b16 %v276
        %v379 = vunpack.c.l.b16 %v277
        %v380 = vunpack.c.h.b16 %v277
        %v381 = vunpack.c.l.b16 %v278
        %v382 = vunpack.c.l.b16 %v279
        %v383 = vunpack.c.h.b16 %v279
        %v384 = vunpack.c.l.b16 %v280
        %v385 = vpack.c.b16 %v340, %v337
        %v386 = vpack.c.b16 %v341, %v338
        %v387 = vpack.c.b16 %v342, %v339
        %v388 = vpack.c.b16 %v346, %v343
        %v389 = vpack.c.b16 %v347, %v344
        %v390 = vpack.c.b16 %v348, %v345
        %v391 = vpack.c.b16 %v352, %v349
        %v392 = vpack.c.b16 %v353, %v350
        %v393 = vpack.c.b16 %v354, %v351
        %v394 = vpack.c.b16 %v358, %v355
        %v395 = vpack.c.b16 %v359, %v356
        %v396 = vpack.c.b16 %v360, %v357
        %v397 = vpack.c.b16 %v364, %v361
        %v398 = vpack.c.b16 %v365, %v362
        %v399 = vpack.c.b16 %v366, %v363
        %v400 = vpack.c.b16 %v370, %v367
        %v401 = vpack.c.b16 %v371, %v368
        %v402 = vpack.c.b16 %v372, %v369
        %v403 = vpack.c.b16 %v376, %v373
        %v404 = vpack.c.b16 %v377, %v374
        %v405 = vpack.c.b16 %v378, %v375
        %v406 = vpack.c.b16 %v382, %v379
        %v407 = vpack.c.b16 %v383, %v380
        %v408 = vpack.c.b16 %v384, %v381
        %433 = vmatpush.bf16.msra.mxu0 %v406
        %434 = vmatpush.bf16.msra.mxu0 %v403
        %435 = vmatpush.bf16.msra.mxu0 %v400
        %436 = vmatpush.bf16.msra.mxu0 %v397
        %437 = vmatpush.bf16.msra.mxu0 %v394
        %438 = vmatpush.bf16.msra.mxu0 %v391
        %439 = vmatpush.bf16.msra.mxu0 %v388
        %440 = vmatpush.bf16.msra.mxu0 %v385
        %441 = vmatmul.bf16.gmra.mxu0 %v304
        %v442 = vpop.f32.mrf.mxu0
        %v443 = vadd.f32 0.0, %v442
        %v444 = vpop.f32.mrf.mxu0
        %445 = vdwg.mxu0
        %446 = vmatpush.bf16.msra.mxu0 %v407
        %447 = vmatpush.bf16.msra.mxu0 %v404
        %448 = vmatpush.bf16.msra.mxu0 %v401
        %449 = vmatpush.bf16.msra.mxu0 %v398
        %450 = vmatpush.bf16.msra.mxu0 %v395
        %451 = vmatpush.bf16.msra.mxu0 %v392
        %452 = vmatpush.bf16.msra.mxu0 %v389
        %453 = vmatpush.bf16.msra.mxu0 %v386
        %454 = vmatmul.bf16.gmra.mxu0 %v304
        %v455 = vpop.f32.mrf.mxu0
        %v456 = vadd.f32 0.0, %v455
        %v457 = vpop.f32.mrf.mxu0
        %458 = vdwg.mxu0
        %459 = vmatpush.bf16.msra.mxu0 %v408
        %460 = vmatpush.bf16.msra.mxu0 %v405
        %461 = vmatpush.bf16.msra.mxu0 %v402
        %462 = vmatpush.bf16.msra.mxu0 %v399
        %463 = vmatpush.bf16.msra.mxu0 %v396
        %464 = vmatpush.bf16.msra.mxu0 %v393
        %465 = vmatpush.bf16.msra.mxu0 %v390
        %466 = vmatpush.bf16.msra.mxu0 %v387
        %467 = vmatmul.bf16.gmra.mxu0 %v304
        %v468 = vpop.f32.mrf.mxu0
        %v469 = vadd.f32 0.0, %v468
        %v470 = vpop.f32.mrf.mxu0
        %471 = vdwg.mxu0
        %v472 = vpack.c.bf16 %v443, %v443
        %v473 = vpack.c.bf16 %v456, %v456
        %v474 = vpack.c.bf16 %v469, %v469
        %vm475 = vcmask 261120
        %v477 = vsel %vm475, %v472, 0
        %v480 = vsel %vm475, %v473, 0
        %482 = vmatpush.bf16.xpose.msra.mxu0 0
        %483 = vmatpush.bf16.xpose.msra.mxu0 0
        %484 = vmatpush.bf16.xpose.msra.mxu0 0
        %485 = vmatpush.bf16.xpose.msra.mxu0 0
        %486 = vmatpush.bf16.xpose.msra.mxu0 0
        %487 = vmatpush.bf16.xpose.msra.mxu0 0
        %488 = vmatpush.bf16.xpose.msra.mxu0 0
        %489 = vmatpush.bf16.xpose.msra.mxu0 %v480
        %490 = vmatmul.bf16.gmra.mxu0 %v477
        %v491 = vpop.f32.mrf.mxu0
        %v492 = vadd.f32 0.0, %v491
        %v493 = vpop.f32.mrf.mxu0
        %494 = vdwg.mxu0
        %v495 = vsel %vm302, %v492, -inf
        %vm496 = vcmask 64512
        %v497 = vsel %vm496, %v495, -inf
        %498 = vmax.xlane.f32.xlu0 %v497
        %v499 = vpop.xlane.xlu0 %498
        %v500 = vsub.f32 %v495, %v499
        %v501 = vmul.f32 %v500, 1.442695
        %v502 = vpow.pop %v501
        %v503 = vsel %vm496, %v502, 0.0
        %504 = vadd.xlane.f32.xlu0 %v503
        %v505 = vpop.xlane.xlu0 %504
        %v506 = vpack.c.bf16 %v502, %v502
        %v508 = vsel %vm496, %v506, 0
        %vm510 = vcmask 1043456
        %v512 = vsel %vm510, %v474, 0
        %514 = vmatpush.bf16.msra.mxu0 0
        %515 = vmatpush.bf16.msra.mxu0 0
        %516 = vmatpush.bf16.msra.mxu0 0
        %517 = vmatpush.bf16.msra.mxu0 0
        %518 = vmatpush.bf16.msra.mxu0 0
        %519 = vmatpush.bf16.msra.mxu0 0
        %520 = vmatpush.bf16.msra.mxu0 0
        %521 = vmatpush.bf16.msra.mxu0 %v512
        %522 = vmatmul.bf16.gmra.mxu0 %v508
        %v523 = vpop.f32.mrf.mxu0
        %v524 = vadd.f32 0.0, %v523
        %v525 = vpop.f32.mrf.mxu0
        %526 = vdwg.mxu0
        %v527 = vrcp.pop %v505
        %v528 = vmul.f32 %v524, %v527
        %v529 = vpack.c.bf16 %v528, %v528
        %531 = vrot.lane.b32.xlu0 %v472, 96
        %v532 = vpop.permute.xlu0 %531
        %534 = vrot.lane.b32.xlu0 %v473, 96
        %v535 = vpop.permute.xlu0 %534
        %v537 = vsel %vm475, %v532, 0
        %v540 = vsel %vm475, %v535, 0
        %542 = vmatpush.bf16.xpose.msra.mxu0 0
        %543 = vmatpush.bf16.xpose.msra.mxu0 0
        %544 = vmatpush.bf16.xpose.msra.mxu0 0
        %545 = vmatpush.bf16.xpose.msra.mxu0 0
        %546 = vmatpush.bf16.xpose.msra.mxu0 0
        %547 = vmatpush.bf16.xpose.msra.mxu0 0
        %548 = vmatpush.bf16.xpose.msra.mxu0 0
        %549 = vmatpush.bf16.xpose.msra.mxu0 %v540
        %550 = vmatmul.bf16.gmra.mxu0 %v537
        %v551 = vpop.f32.mrf.mxu0
        %v552 = vadd.f32 0.0, %v551
        %v553 = vpop.f32.mrf.mxu0
        %554 = vdwg.mxu0
        %v555 = vsel %vm302, %v552, -inf
        %v556 = vsel %vm496, %v555, -inf
        %557 = vmax.xlane.f32.xlu0 %v556
        %v558 = vpop.xlane.xlu0 %557
        %v559 = vsub.f32 %v555, %v558
        %v560 = vmul.f32 %v559, 1.442695
        %v561 = vpow.pop %v560
        %v562 = vsel %vm496, %v561, 0.0
        %563 = vadd.xlane.f32.xlu0 %v562
        %v564 = vpop.xlane.xlu0 %563
        %v565 = vpack.c.bf16 %v561, %v561
        %567 = vrot.lane.b32.xlu0 %v474, 96
        %v568 = vpop.permute.xlu0 %567
        %v570 = vsel %vm496, %v565, 0
        %v573 = vsel %vm510, %v568, 0
        %575 = vmatpush.bf16.msra.mxu0 0
        %576 = vmatpush.bf16.msra.mxu0 0
        %577 = vmatpush.bf16.msra.mxu0 0
        %578 = vmatpush.bf16.msra.mxu0 0
        %579 = vmatpush.bf16.msra.mxu0 0
        %580 = vmatpush.bf16.msra.mxu0 0
        %581 = vmatpush.bf16.msra.mxu0 0
        %582 = vmatpush.bf16.msra.mxu0 %v573
        %583 = vmatmul.bf16.gmra.mxu0 %v570
        %v584 = vpop.f32.mrf.mxu0
        %v585 = vadd.f32 0.0, %v584
        %v586 = vpop.f32.mrf.mxu0
        %587 = vdwg.mxu0
        %v588 = vrcp.pop %v564
        %v589 = vmul.f32 %v585, %v588
        %v590 = vpack.c.bf16 %v589, %v589
        %v595 = vunpack.c.l.b16 %v285
        %v596 = vunpack.c.l.b16 %v286
        %v597 = vunpack.c.l.b16 %v287
        %v598 = vunpack.c.l.b16 %v288
        %v599 = vpack.c.b16 %v596, %v595
        %v600 = vpack.c.b16 %v598, %v597
        %v604 = vsel %vm475, %v590, 0
        %606 = vmatpush.bf16.msra.mxu0 0
        %607 = vmatpush.bf16.msra.mxu0 0
        %608 = vmatpush.bf16.msra.mxu0 0
        %609 = vmatpush.bf16.msra.mxu0 0
        %610 = vmatpush.bf16.msra.mxu0 0
        %611 = vmatpush.bf16.msra.mxu0 0
        %612 = vmatpush.bf16.msra.mxu0 %v600
        %613 = vmatpush.bf16.msra.mxu0 %v599
        %614 = vmatmul.bf16.gmra.mxu0 %v604
        %v615 = vpop.f32.mrf.mxu0
        %v616 = vadd.f32 0.0, %v615
        %v617 = vpop.f32.mrf.mxu0
        %618 = vdwg.mxu0
        %v623 = vunpack.c.l.b16 %v281
        %v624 = vunpack.c.l.b16 %v282
        %v625 = vunpack.c.l.b16 %v283
        %v626 = vunpack.c.l.b16 %v284
        %v627 = vpack.c.b16 %v624, %v623
        %v628 = vpack.c.b16 %v626, %v625
        %v632 = vsel %vm475, %v529, 0
        %634 = vmatpush.bf16.msra.mxu0 0
        %635 = vmatpush.bf16.msra.mxu0 0
        %636 = vmatpush.bf16.msra.mxu0 0
        %637 = vmatpush.bf16.msra.mxu0 0
        %638 = vmatpush.bf16.msra.mxu0 0
        %639 = vmatpush.bf16.msra.mxu0 0
        %640 = vmatpush.bf16.msra.mxu0 %v628
        %641 = vmatpush.bf16.msra.mxu0 %v627
        %642 = vmatmul.bf16.gmra.mxu0 %v632
        %v643 = vpop.f32.mrf.mxu0
        %v644 = vadd.f32 %v616, %v643
        %v645 = vpop.f32.mrf.mxu0
        %646 = vdwg.mxu0
        %647 = vrot.lane.b32.xlu0 %v472, 64
        %v648 = vpop.permute.xlu0 %647
        %649 = vrot.lane.b32.xlu0 %v473, 64
        %v650 = vpop.permute.xlu0 %649
        %v652 = vsel %vm475, %v648, 0
        %v655 = vsel %vm475, %v650, 0
        %657 = vmatpush.bf16.xpose.msra.mxu0 0
        %658 = vmatpush.bf16.xpose.msra.mxu0 0
        %659 = vmatpush.bf16.xpose.msra.mxu0 0
        %660 = vmatpush.bf16.xpose.msra.mxu0 0
        %661 = vmatpush.bf16.xpose.msra.mxu0 0
        %662 = vmatpush.bf16.xpose.msra.mxu0 0
        %663 = vmatpush.bf16.xpose.msra.mxu0 0
        %664 = vmatpush.bf16.xpose.msra.mxu0 %v655
        %665 = vmatmul.bf16.gmra.mxu0 %v652
        %v666 = vpop.f32.mrf.mxu0
        %v667 = vadd.f32 0.0, %v666
        %v668 = vpop.f32.mrf.mxu0
        %669 = vdwg.mxu0
        %v670 = vsel %vm302, %v667, -inf
        %v671 = vsel %vm496, %v670, -inf
        %672 = vmax.xlane.f32.xlu0 %v671
        %v673 = vpop.xlane.xlu0 %672
        %v674 = vsub.f32 %v670, %v673
        %v675 = vmul.f32 %v674, 1.442695
        %v676 = vpow.pop %v675
        %v677 = vsel %vm496, %v676, 0.0
        %678 = vadd.xlane.f32.xlu0 %v677
        %v679 = vpop.xlane.xlu0 %678
        %v680 = vpack.c.bf16 %v676, %v676
        %681 = vrot.lane.b32.xlu0 %v474, 64
        %v682 = vpop.permute.xlu0 %681
        %v684 = vsel %vm496, %v680, 0
        %v687 = vsel %vm510, %v682, 0
        %689 = vmatpush.bf16.msra.mxu0 0
        %690 = vmatpush.bf16.msra.mxu0 0
        %691 = vmatpush.bf16.msra.mxu0 0
        %692 = vmatpush.bf16.msra.mxu0 0
        %693 = vmatpush.bf16.msra.mxu0 0
        %694 = vmatpush.bf16.msra.mxu0 0
        %695 = vmatpush.bf16.msra.mxu0 0
        %696 = vmatpush.bf16.msra.mxu0 %v687
        %697 = vmatmul.bf16.gmra.mxu0 %v684
        %v698 = vpop.f32.mrf.mxu0
        %v699 = vadd.f32 0.0, %v698
        %v700 = vpop.f32.mrf.mxu0
        %701 = vdwg.mxu0
        %v702 = vrcp.pop %v679
        %v703 = vmul.f32 %v699, %v702
        %v704 = vpack.c.bf16 %v703, %v703
        %v709 = vunpack.c.l.b16 %v289
        %v710 = vunpack.c.l.b16 %v290
        %v711 = vunpack.c.l.b16 %v291
        %v712 = vunpack.c.l.b16 %v292
        %v713 = vpack.c.b16 %v710, %v709
        %v714 = vpack.c.b16 %v712, %v711
        %v718 = vsel %vm475, %v704, 0
        %720 = vmatpush.bf16.msra.mxu0 0
        %721 = vmatpush.bf16.msra.mxu0 0
        %722 = vmatpush.bf16.msra.mxu0 0
        %723 = vmatpush.bf16.msra.mxu0 0
        %724 = vmatpush.bf16.msra.mxu0 0
        %725 = vmatpush.bf16.msra.mxu0 0
        %726 = vmatpush.bf16.msra.mxu0 %v714
        %727 = vmatpush.bf16.msra.mxu0 %v713
        %728 = vmatmul.bf16.gmra.mxu0 %v718
        %v729 = vpop.f32.mrf.mxu0
        %v730 = vadd.f32 0.0, %v729
        %v731 = vpop.f32.mrf.mxu0
        %732 = vdwg.mxu0
        %v733 = vadd.f32 %v644, %v730
        %734 = vrot.lane.b32.xlu0 %v472, 32
        %v735 = vpop.permute.xlu0 %734
        %736 = vrot.lane.b32.xlu0 %v473, 32
        %v737 = vpop.permute.xlu0 %736
        %v739 = vsel %vm475, %v735, 0
        %v742 = vsel %vm475, %v737, 0
        %744 = vmatpush.bf16.xpose.msra.mxu0 0
        %745 = vmatpush.bf16.xpose.msra.mxu0 0
        %746 = vmatpush.bf16.xpose.msra.mxu0 0
        %747 = vmatpush.bf16.xpose.msra.mxu0 0
        %748 = vmatpush.bf16.xpose.msra.mxu0 0
        %749 = vmatpush.bf16.xpose.msra.mxu0 0
        %750 = vmatpush.bf16.xpose.msra.mxu0 0
        %751 = vmatpush.bf16.xpose.msra.mxu0 %v742
        %752 = vmatmul.bf16.gmra.mxu0 %v739
        %v753 = vpop.f32.mrf.mxu0
        %v754 = vadd.f32 0.0, %v753
        %v755 = vpop.f32.mrf.mxu0
        %756 = vdwg.mxu0
        %v757 = vsel %vm302, %v754, -inf
        %v758 = vsel %vm496, %v757, -inf
        %759 = vmax.xlane.f32.xlu0 %v758
        %v760 = vpop.xlane.xlu0 %759
        %v761 = vsub.f32 %v757, %v760
        %v762 = vmul.f32 %v761, 1.442695
        %v763 = vpow.pop %v762
        %v764 = vsel %vm496, %v763, 0.0
        %765 = vadd.xlane.f32.xlu0 %v764
        %v766 = vpop.xlane.xlu0 %765
        %v767 = vpack.c.bf16 %v763, %v763
        %768 = vrot.lane.b32.xlu0 %v474, 32
        %v769 = vpop.permute.xlu0 %768
        %v771 = vsel %vm496, %v767, 0
        %v774 = vsel %vm510, %v769, 0
        %776 = vmatpush.bf16.msra.mxu0 0
        %777 = vmatpush.bf16.msra.mxu0 0
        %778 = vmatpush.bf16.msra.mxu0 0
        %779 = vmatpush.bf16.msra.mxu0 0
        %780 = vmatpush.bf16.msra.mxu0 0
        %781 = vmatpush.bf16.msra.mxu0 0
        %782 = vmatpush.bf16.msra.mxu0 0
        %783 = vmatpush.bf16.msra.mxu0 %v774
        %784 = vmatmul.bf16.gmra.mxu0 %v771
        %v785 = vpop.f32.mrf.mxu0
        %v786 = vadd.f32 0.0, %v785
        %v787 = vpop.f32.mrf.mxu0
        %788 = vdwg.mxu0
        %v789 = vrcp.pop %v766
        %v790 = vmul.f32 %v786, %v789
        %v791 = vpack.c.bf16 %v790, %v790
        %v796 = vunpack.c.l.b16 %v293
        %v797 = vunpack.c.l.b16 %v294
        %v798 = vunpack.c.l.b16 %v295
        %v799 = vunpack.c.l.b16 %v296
        %v800 = vpack.c.b16 %v797, %v796
        %v801 = vpack.c.b16 %v799, %v798
        %v805 = vsel %vm475, %v791, 0
        %807 = vmatpush.bf16.msra.mxu0 0
        %808 = vmatpush.bf16.msra.mxu0 0
        %809 = vmatpush.bf16.msra.mxu0 0
        %810 = vmatpush.bf16.msra.mxu0 0
        %811 = vmatpush.bf16.msra.mxu0 0
        %812 = vmatpush.bf16.msra.mxu0 0
        %813 = vmatpush.bf16.msra.mxu0 %v801
        %814 = vmatpush.bf16.msra.mxu0 %v800
        %815 = vmatmul.bf16.gmra.mxu0 %v805
        %v816 = vpop.f32.mrf.mxu0
        %v817 = vadd.f32 0.0, %v816
        %v818 = vpop.f32.mrf.mxu0
        %819 = vdwg.mxu0
        %v820 = vadd.f32 %v733, %v817
        %v822 = vperm.slane %v297, 0
        %v824 = vadd.f32 %v820, %v822
        %825 = vst [vmem:[%s247] sm:$0xff] %v824
        %s826 = sand.u32 %s119, 1
        %s827 = scalar_lea.sflag [#allocation4], %s826
        %s828 = sand.u32 %s119, 1
        %s829 = smul.addr %s828, 8
        %s830 = scalar_lea.vmem [#allocation8], %s829
        // Predicated region
        $region49: #{multi_head_attention_packed.1} parent=35 // pred_check
          %p831 = pneg %p129
        $region50: #{multi_head_attention_packed.1} parent=35 // pred_check_branch
          %833 = sbr.rel (%p831) target = $region52
        $region51: #{multi_head_attention_packed.1} parent=35 // pred_region
          %835 = vsyncadd %s827, 0
          %s836 = smul.addr %s22, 8
          %s837 = scalar_lea.hbm %s4, %s836
          %s839 = sshll.u32 %s830, 4
          %s840 = int_to_ptr.vmem [resolvable:$true] %s839
          %s841 = sshll.u32 %s837, 4
          %s842 = int_to_ptr.hbm [resolvable:$true] %s841
          %844 = dma.vmem_to_hbm [thread:$0]  %s840, 128, %s842, %s827
        $region52: #{multi_head_attention_packed.1} parent=35 // pred_fallthru
          _
      $region36: #{multi_head_attention_packed.1} parent=5 // pred_fallthru
        _
      %p845 = scmp.le.s32.totalorder 2, %s17
      // Predicated region
      $region53: #{multi_head_attention_packed.1} parent=5 // pred_check
        %p846 = pneg %p845
      $region54: #{multi_head_attention_packed.1} parent=5 // pred_check_branch
        %848 = sbr.rel (%p846) target = $region56
      $region55: #{multi_head_attention_packed.1} parent=5 // pred_region
        %s849 = ssub.s32 %s17, 2
        // Predicated region
        $region57: #{multi_head_attention_packed.1} parent=55 // pred_check
          %p850 = pneg %p135
        $region58: #{multi_head_attention_packed.1} parent=55 // pred_check_branch
          %852 = sbr.rel (%p850) target = $region60
        $region59: #{multi_head_attention_packed.1} parent=55 // pred_region
          %s853 = sand.u32 %s120, 1
          %s854 = scalar_lea.sflag [#allocation4], %s853
          %s855 = sand.u32 %s120, 1
          %s856 = smul.addr %s855, 8
          %s857 = scalar_lea.vmem [#allocation8], %s856
          %859 = dma.done %s854, 128
        $region60: #{multi_head_attention_packed.1} parent=55 // pred_fallthru
          _
      $region56: #{multi_head_attention_packed.1} parent=5 // pred_fallthru
        _
    $region6: #{multi_head_attention_packed.1} parent=1 // loop_footer
      %s21 = sadd.s32 1, %s17
    $region7: #{multi_head_attention_packed.1} parent=1 // loop_footer_branch
      %16 = sbr.rel target = $region3
    $region8: #{multi_head_attention_packed.1} parent=1 // loop_exit
      _
    %860 = vsyncpa [#allocation3], 1
    %s861 = scalar_lea.sflag [#allocation3], 1
    %862 = vsyncpa %s861, 1
    %863 = vsyncpa [#allocation6], 1
    %864 = vsyncpa [#allocation4], 1
    %s865 = scalar_lea.sflag [#allocation4], 1
    %866 = vsyncpa %s865, 1

</llo_original>
